<compile_context>
chip_gen: v7x
topology: tpu7x:2x2x1
jax: 0.10.0
libtpu: 0.0.40
codegen_flags: <defaults>
</compile_context>

<pallas_src>
import jax
import jax.numpy as jnp
from jax.experimental import pallas as pl
from jax.experimental.pallas import tpu as pltpu

_NEG_BIG = jnp.finfo(jnp.float32).min  # fill value for padded vocab lanes


def _logits_kernel(emb_ref, logits_ref):
    """Inference path: broadcast store only (no CE compute, no target input)."""
    B, Vp = logits_ref.shape
    logits_ref[...] = jnp.broadcast_to(emb_ref[...], (B, Vp))


def _logits_loss_kernel(emb_ref, y_ref, logits_ref, loss_ref):
    """Training path.

    emb_ref:    (1, Vp) f32 VMEM  -- embedding column, lane-padded with _NEG_BIG
    y_ref:      (B,)    i32 SMEM  -- last-step targets (scalar path)
    logits_ref: (B, Vp) f32 VMEM  -- lane-dense logits output
    loss_ref:   (1,)    f32 SMEM  -- scalar loss
    """
    B, Vp = logits_ref.shape
    emb = emb_ref[...]                                      # (1, Vp)

    # logits = embedding column broadcast across the batch (single vector store).
    logits_ref[...] = jnp.broadcast_to(emb, (B, Vp))

    # log-sum-exp computed once on the un-broadcast row: identical for every
    # batch element. Padded lanes are _NEG_BIG -> exp underflows to 0.
    m = jnp.max(emb)                                        # scalar
    lse = m + jnp.log(jnp.sum(jnp.exp(emb - m)))            # scalar

    # Target logit per batch row via lane mask against SMEM scalar targets.
    # jnp.where (select) avoids NaN from the padded lanes; targets < V < Vp so
    # padded lanes are never selected.
    col = jax.lax.broadcasted_iota(jnp.int32, (1, Vp), 1)   # (1, Vp)
    tgt_sum = jnp.float32(0.0)
    for b in range(B):                                      # B is static & tiny
        yb = y_ref[b]                                       # SMEM scalar read
        tgt_sum = tgt_sum + jnp.sum(jnp.where(col == yb, emb, 0.0))

    # loss = mean_b(lse - target_logit_b) = lse - mean_b(target_logit_b)
    loss_ref[0] = lse - tgt_sum * (1.0 / B)


def mhllm_forward(x, emb_weight, y=None):
    """Pallas equivalent of MHLLM.forward.

    x:          (B, T) int32 tokens (only B is used, matching the PyTorch code)
    emb_weight: (V, 1) float32 embedding table (nn.Embedding(vocab_size, 1).weight)
    y:          optional (B, T) int32 targets; cross-entropy is taken on y[:, -1]
    Returns (logits (B, V) f32, loss scalar f32 or None).
    """
    B, _ = x.shape
    V = emb_weight.shape[0]
    Vp = ((V + 127) // 128) * 128                           # lane-dense vocab axis

    # (1, Vp) embedding row; padded lanes get a huge negative so they drop out
    # of the logsumexp and are sliced off the returned logits.
    emb_row = emb_weight[:, 0].astype(jnp.float32).reshape(1, V)
    emb_row = jnp.pad(emb_row, ((0, 0), (0, Vp - V)), constant_values=_NEG_BIG)

    if y is None:
        # Static variant: skips the entire CE path and the target DMA.
        logits_p = pl.pallas_call(
            _logits_kernel,
            out_shape=jax.ShapeDtypeStruct((B, Vp), jnp.float32),
            in_specs=[pl.BlockSpec(memory_space=pltpu.MemorySpace.VMEM)],
            out_specs=pl.BlockSpec(memory_space=pltpu.MemorySpace.VMEM),
        )(emb_row)
        return logits_p[:, :V], None

    y_last = y[:, -1].astype(jnp.int32)                     # (B,) -> SMEM

    logits_p, loss = pl.pallas_call(
        _logits_loss_kernel,
        out_shape=(
            jax.ShapeDtypeStruct((B, Vp), jnp.float32),     # lane-dense logits
            jax.ShapeDtypeStruct((1,), jnp.float32),        # scalar loss (SMEM)
        ),
        in_specs=[
            pl.BlockSpec(memory_space=pltpu.MemorySpace.VMEM),   # emb row
            pl.BlockSpec(memory_space=pltpu.MemorySpace.SMEM),   # targets
        ],
        out_specs=(
            pl.BlockSpec(memory_space=pltpu.MemorySpace.VMEM),   # logits
            pl.BlockSpec(memory_space=pltpu.MemorySpace.SMEM),   # loss
        ),
    )(emb_row, y_last)

    return logits_p[:, :V], loss[0]


if __name__ == "__main__":
    key = jax.random.PRNGKey(0)
    k_emb, k_x, k_y = jax.random.split(key, 3)

    V = 100          # vocab_size (module default)
    B, T = 2, 8      # small batch / sequence

    # nn.Embedding default init: weight ~ N(0, 1), shape (vocab_size, 1)
    emb_weight = jax.random.normal(k_emb, (V, 1), dtype=jnp.float32)
    x = jax.random.randint(k_x, (B, T), 0, V, dtype=jnp.int32)
    y = jax.random.randint(k_y, (B, T), 0, V, dtype=jnp.int32)

    # Training-style call (logits + loss) and inference-style call (logits only).
    logits, loss = mhllm_forward(x, emb_weight, y)
    logits_inf, loss_inf = mhllm_forward(x, emb_weight, None)
    jax.block_until_ready((logits, loss, logits_inf))

    # Pure-JAX reference check of the PyTorch semantics.
    ref_logits = jnp.broadcast_to(emb_weight[:, 0][None, :], (B, V))
    ref_lse = jax.nn.logsumexp(ref_logits, axis=-1)
    ref_loss = jnp.mean(ref_lse - ref_logits[jnp.arange(B), y[:, -1]])

    assert logits.shape == (B, V) and logits_inf.shape == (B, V)
    assert loss_inf is None
    assert jnp.allclose(logits, ref_logits, atol=1e-5), "logits mismatch"
    assert jnp.allclose(logits_inf, ref_logits, atol=1e-5), "inference logits mismatch"
    assert jnp.allclose(loss, ref_loss, atol=1e-5), "loss mismatch"

    print("KERNEL_OK")
</pallas_src>

<mosaic_0001>
module attributes {stable_mosaic.version = 11 : i64} {
  func.func @_logits_loss_kernel(%arg0: memref<1x128xf32, #tpu.memory_space<vmem>>, %arg1: memref<2xi32, #tpu.memory_space<smem>>, %arg2: memref<2x128xf32, #tpu.memory_space<vmem>>, %arg3: memref<1xf32, #tpu.memory_space<smem>>) attributes {dimension_semantics = [], scalar_prefetch = 0 : i64, scratch_operands = 0 : i64, tpu.core_type = #tpu.core_type<tc>} {
    %c0 = arith.constant 0 : index
    %c0_0 = arith.constant 0 : index
    %0 = vector.load %arg0[%c0, %c0_0] : memref<1x128xf32, #tpu.memory_space<vmem>>, vector<1x128xf32>
    %1 = vector.shape_cast %0 : vector<1x128xf32> to vector<1x128xf32>
    %2 = vector.broadcast %1 : vector<1x128xf32> to vector<2x128xf32>
    %c0_1 = arith.constant 0 : index
    %c0_2 = arith.constant 0 : index
    %3 = vector.load %arg2[%c0_1, %c0_2] : memref<2x128xf32, #tpu.memory_space<vmem>>, vector<2x128xf32>
    tpu.vector_store %arg2[%c0_1, %c0_2], %2 {strides = array<i32>} : memref<2x128xf32, #tpu.memory_space<vmem>>, vector<2x128xf32>,
    %4 = vector.shape_cast %0 : vector<1x128xf32> to vector<1x1x128xf32>
    %cst = arith.constant dense<0xFF800000> : vector<1xf32>
    %5 = vector.multi_reduction <maximumf>, %4, %cst [1, 2] : vector<1x1x128xf32> to vector<1xf32>
    %6 = vector.shape_cast %5 : vector<1xf32> to vector<1x1x1xf32>
    %7 = vector.extract %6[0, 0, 0] : f32 from vector<1x1x1xf32>
    %8 = vector.broadcast %7 : f32 to vector<1x128xf32>
    %9 = arith.subf %0, %8 : vector<1x128xf32>
    %10 = math.exp %9 : vector<1x128xf32>
    %11 = vector.shape_cast %10 : vector<1x128xf32> to vector<1x1x128xf32>
    %cst_3 = arith.constant dense<0.000000e+00> : vector<1xf32>
    %12 = vector.multi_reduction <add>, %11, %cst_3 [1, 2] : vector<1x1x128xf32> to vector<1xf32>
    %13 = vector.shape_cast %12 : vector<1xf32> to vector<1x1x1xf32>
    %14 = vector.extract %13[0, 0, 0] : f32 from vector<1x1x1xf32>
    %15 = math.log %14 : f32
    %16 = arith.addf %7, %15 : f32
    %17 = tpu.iota {dimensions = array<i32: 1>} : vector<1x128xi32>
    %c0_4 = arith.constant 0 : index
    %18 = memref.load %arg1[%c0_4] : memref<2xi32, #tpu.memory_space<smem>>
    %19 = vector.broadcast %18 : i32 to vector<1x128xi32>
    %20 = arith.cmpi eq, %17, %19 : vector<1x128xi32>
    %cst_5 = arith.constant 0.000000e+00 : f32
    %21 = vector.broadcast %cst_5 : f32 to vector<1x128xf32>
    %22 = arith.select %20, %0, %21 : vector<1x128xi1>, vector<1x128xf32>
    %23 = vector.shape_cast %22 : vector<1x128xf32> to vector<1x1x128xf32>
    %cst_6 = arith.constant dense<0.000000e+00> : vector<1xf32>
    %24 = vector.multi_reduction <add>, %23, %cst_6 [1, 2] : vector<1x1x128xf32> to vector<1xf32>
    %25 = vector.shape_cast %24 : vector<1xf32> to vector<1x1x1xf32>
    %26 = vector.extract %25[0, 0, 0] : f32 from vector<1x1x1xf32>
    %cst_7 = arith.constant 0.000000e+00 : f32
    %27 = arith.addf %cst_7, %26 : f32
    %c1 = arith.constant 1 : index
    %28 = memref.load %arg1[%c1] : memref<2xi32, #tpu.memory_space<smem>>
    %29 = vector.broadcast %28 : i32 to vector<1x128xi32>
    %30 = arith.cmpi eq, %17, %29 : vector<1x128xi32>
    %cst_8 = arith.constant 0.000000e+00 : f32
    %31 = vector.broadcast %cst_8 : f32 to vector<1x128xf32>
    %32 = arith.select %30, %0, %31 : vector<1x128xi1>, vector<1x128xf32>
    %33 = vector.shape_cast %32 : vector<1x128xf32> to vector<1x1x128xf32>
    %cst_9 = arith.constant dense<0.000000e+00> : vector<1xf32>
    %34 = vector.multi_reduction <add>, %33, %cst_9 [1, 2] : vector<1x1x128xf32> to vector<1xf32>
    %35 = vector.shape_cast %34 : vector<1xf32> to vector<1x1x1xf32>
    %36 = vector.extract %35[0, 0, 0] : f32 from vector<1x1x1xf32>
    %37 = arith.addf %27, %36 : f32
    %cst_10 = arith.constant 5.000000e-01 : f32
    %38 = arith.mulf %37, %cst_10 : f32
    %39 = arith.subf %16, %38 : f32
    %c0_11 = arith.constant 0 : index
    %40 = memref.load %arg3[%c0_11] : memref<1xf32, #tpu.memory_space<smem>>
    memref.store %39, %arg3[%c0_11] : memref<1xf32, #tpu.memory_space<smem>>
    return
  }
}

</mosaic_0001>

<llo_original>
// kernel: tpu_custom_call.1
$region0: #{tpu_custom_call.1}
  #allocation0 [shape = 'u32[]', space=smem, size = 0x4, offset = 0x4, fixed_abs, tag = 'smem constant byte address 0x4 - core index']
  #allocation1 [shape = 'u32[144,128]{1,0:T(1,128)}', space=vmem, size = 0x12000, scoped, tag = 'internal scratch']
  %s0 = inlined_call_operand.hbm [shape: f32[1,128], index: 0, kind: input, shape index: {}]
  %s1 = inlined_call_operand.vmem [shape: s32[2], index: 1, kind: input, shape index: {}]
  %s2 = inlined_call_operand.hbm [shape: f32[2,128], index: 2, kind: output, shape index: {0}]
  %s3 = inlined_call_operand.hbm [shape: f32[1], index: 3, kind: output, shape index: {1}]
  %4 = xla_tuple %s2, %s3
  %s5 = sld [smem:[#allocation0]]
  $region34: #{tpu_custom_call.1} parent=0
    _
  %s7 = ssub.s32 1, %s5
  %s8 = scalar_select 0, %s7, %s5
  $region1: #{tpu_custom_call.1} parent=0
    #allocation2 [shape = 'u8[512]{0}', space=vmem, size = 0x400, scoped, tag = 'input window, operand 0, single buffered']
    #allocation3 [shape = 's32[1]{0}', space=sflag, size = 0x4, scoped, tag = 'scoped memory for tpu_custom_call.1']
    #allocation4 [shape = 's32[1]{0}', space=sflag, size = 0x4, scoped, tag = 'scoped memory for tpu_custom_call.1']
    #allocation5 [shape = 's32[1]{0}', space=sflag, size = 0x4, scoped, tag = 'scoped memory for tpu_custom_call.1']
    #allocation6 [shape = 's32[1]{0}', space=sflag, size = 0x4, scoped, tag = 'scoped memory for tpu_custom_call.1']
    #allocation7 [shape = 'u8[512]{0}', space=smem, size = 0x200, scoped, tag = 'input window, operand 1, single buffered']
    #allocation8 [shape = 'u8[1024]{0}', space=vmem, size = 0x400, scoped, tag = 'output window, operand 0, single buffered']
    #allocation9 [shape = 'u8[512]{0}', space=smem, size = 0x200, scoped, tag = 'output window, operand 1, single buffered']
    %9 = vsyncpa [#allocation3], 0
    %10 = vsyncpa [#allocation6], 0
    %11 = vsyncpa [#allocation4], 0
    %12 = vsyncpa [#allocation5], 0
    // Predicated region
    $region2: #{tpu_custom_call.1} parent=1 // pred_check
      _
    $region3: #{tpu_custom_call.1} parent=1 // pred_check_branch
      %14 = sbr.rel (0) target = $region5
    $region4: #{tpu_custom_call.1} parent=1 // pred_region
      %s16 = ssub.s32 16, 16
      %17 = vsyncadd [#allocation3], %s16
      %s19 = sshll.u32 [#allocation2], 4
      %s20 = int_to_ptr.vmem [resolvable:$true] %s19
      %22 = dma.hbm_to_vmem [thread:$0]  %s0, 16, %s20, [#allocation3]
    $region5: #{tpu_custom_call.1} parent=1 // pred_fallthru
      _
    // Predicated region
    $region6: #{tpu_custom_call.1} parent=1 // pred_check
      _
    $region7: #{tpu_custom_call.1} parent=1 // pred_check_branch
      %24 = sbr.rel (0) target = $region9
    $region8: #{tpu_custom_call.1} parent=1 // pred_region
      %s26 = ssub.s32 16, 16
      %27 = vsyncadd [#allocation6], %s26
      %s29 = sshll.u32 %s1, 4
      %s30 = int_to_ptr.vmem [resolvable:$true] %s29
      %32 = dma.vmem_to_smem %s30, 16, [#allocation7], [#allocation6]
    $region9: #{tpu_custom_call.1} parent=1 // pred_fallthru
      _
    // Predicated region
    $region10: #{tpu_custom_call.1} parent=1 // pred_check
      _
    $region11: #{tpu_custom_call.1} parent=1 // pred_check_branch
      %34 = sbr.rel (0) target = $region13
    $region12: #{tpu_custom_call.1} parent=1 // pred_region
      %35 = dma.done [#allocation3], 16
    $region13: #{tpu_custom_call.1} parent=1 // pred_fallthru
      _
    // Predicated region
    $region14: #{tpu_custom_call.1} parent=1 // pred_check
      _
    $region15: #{tpu_custom_call.1} parent=1 // pred_check_branch
      %37 = sbr.rel (0) target = $region17
    $region16: #{tpu_custom_call.1} parent=1 // pred_region
      %38 = dma.done [#allocation6], 16
    $region17: #{tpu_custom_call.1} parent=1 // pred_fallthru
      _
    %39 = sfence
    %v40 = vld [vmem:[#allocation2] sm:$0x1]
    %v42 = vlaneseq
    %v43 = vshrl.u32 %v42, 7
    %v44 = vsub.s32 0, %v43
    %v45 = vrot.slane %v40, %v44
    %47 = vst [vmem:[#allocation8] sm:$0x3] %v45
    %vm48 = vcmask 1040384
    %v49 = vsel %vm48, %v40, -inf
    %50 = vmax.xlane.f32.xlu0 %v49
    %v51 = vpop.xlane.xlu0 %50
    %v52 = vrot.slane %v51, 4
    %v53 = vmax.f32 %v51, %v52
    %v54 = vrot.slane %v53, 2
    %v55 = vmax.f32 %v53, %v54
    %v56 = vrot.slane %v55, 1
    %v57 = vmax.f32 %v55, %v56
    %s58 = vtos %v57
    %v59 = vstv %s58
    %v60 = vsub.f32 %v40, %v59
    %v61 = vmul.f32 %v60, 1.442695
    %v62 = vpow.pop %v61
    %v63 = vsel %vm48, %v62, 0.0
    %64 = vadd.xlane.f32.xlu0 %v63
    %v65 = vpop.xlane.xlu0 %64
    %v66 = vrot.slane %v65, 4
    %v67 = vadd.f32 %v65, %v66
    %v68 = vrot.slane %v67, 2
    %v69 = vadd.f32 %v67, %v68
    %v70 = vrot.slane %v69, 1
    %v71 = vadd.f32 %v69, %v70
    %s72 = vtos %v71
    %v73 = vstv %s72
    %v74 = vlog2.pop %v73
    %v75 = vmul.f32 %v74, 0.6931472
    %s76 = vtos %v75
    %s77 = sadd.f32 %s58, %s76
    %v78 = vlaneseq
    %v79 = vand.u32 %v78, 127
    %s80 = sld [smem:[#allocation7]]
    %v81 = vstv %s80
    %vm82 = vcmp.eq.s32.totalorder %v79, %v81
    %v83 = vsel %vm82, %v40, 0.0
    %v84 = vsel %vm48, %v83, 0.0
    %85 = vadd.xlane.f32.xlu0 %v84
    %v86 = vpop.xlane.xlu0 %85
    %v87 = vrot.slane %v86, 4
    %v88 = vadd.f32 %v86, %v87
    %v89 = vrot.slane %v88, 2
    %v90 = vadd.f32 %v88, %v89
    %v91 = vrot.slane %v90, 1
    %v92 = vadd.f32 %v90, %v91
    %s93 = vtos %v92
    %s94 = sadd.f32 %s93, 0.0
    %s95 = sld [smem:[#allocation7 + $0x1]]
    %v96 = vstv %s95
    %vm97 = vcmp.eq.s32.totalorder %v79, %v96
    %v98 = vsel %vm97, %v40, 0.0
    %v99 = vsel %vm48, %v98, 0.0
    %100 = vadd.xlane.f32.xlu0 %v99
    %v101 = vpop.xlane.xlu0 %100
    %v102 = vrot.slane %v101, 4
    %v103 = vadd.f32 %v101, %v102
    %v104 = vrot.slane %v103, 2
    %v105 = vadd.f32 %v103, %v104
    %v106 = vrot.slane %v105, 1
    %v107 = vadd.f32 %v105, %v106
    %s108 = vtos %v107
    %s109 = sadd.f32 %s94, %s108
    %s110 = smul.f32 %s109, 0.5
    %s111 = ssub.f32 %s77, %s110
    %s112 = scalar_lea.smem [#allocation9], 0
    %113 = sst [smem:[%s112]] %s111
    // Predicated region
    $region18: #{tpu_custom_call.1} parent=1 // pred_check
      _
    $region19: #{tpu_custom_call.1} parent=1 // pred_check_branch
      %115 = sbr.rel (0) target = $region21
    $region20: #{tpu_custom_call.1} parent=1 // pred_region
      %s117 = ssub.s32 32, 32
      %118 = vsyncadd [#allocation4], %s117
      %s120 = sshll.u32 [#allocation8], 4
      %s121 = int_to_ptr.vmem [resolvable:$true] %s120
      %123 = dma.vmem_to_hbm [thread:$0]  %s121, 32, %s2, [#allocation4]
    $region21: #{tpu_custom_call.1} parent=1 // pred_fallthru
      _
    // Predicated region
    $region22: #{tpu_custom_call.1} parent=1 // pred_check
      _
    $region23: #{tpu_custom_call.1} parent=1 // pred_check_branch
      %125 = sbr.rel (0) target = $region25
    $region24: #{tpu_custom_call.1} parent=1 // pred_region
      %s127 = ssub.s32 16, 16
      %128 = vsyncadd [#allocation5], %s127
      %131 = dma.smem_to_hbm [#allocation9], 16, %s3, [#allocation5]
    $region25: #{tpu_custom_call.1} parent=1 // pred_fallthru
      _
    // Predicated region
    $region26: #{tpu_custom_call.1} parent=1 // pred_check
      _
    $region27: #{tpu_custom_call.1} parent=1 // pred_check_branch
      %133 = sbr.rel (0) target = $region29
    $region28: #{tpu_custom_call.1} parent=1 // pred_region
      %134 = dma.done [#allocation4], 32
    $region29: #{tpu_custom_call.1} parent=1 // pred_fallthru
      _
    // Predicated region
    $region30: #{tpu_custom_call.1} parent=1 // pred_check
      _
    $region31: #{tpu_custom_call.1} parent=1 // pred_check_branch
      %136 = sbr.rel (0) target = $region33
    $region32: #{tpu_custom_call.1} parent=1 // pred_region
      %137 = dma.done [#allocation5], 16
    $region33: #{tpu_custom_call.1} parent=1 // pred_fallthru
      _
    %138 = sfence
    %139 = vsyncpa [#allocation3], 1
    %140 = vsyncpa [#allocation4], 1
    %141 = vsyncpa [#allocation5], 1
    %142 = vsyncpa [#allocation6], 1

</llo_original>
